<compile_context>
chip_gen: v6e
topology: v6e:2x2x1
jax: 0.10.0
libtpu: 0.0.40
codegen_flags: <defaults>
</compile_context>

<pallas_src>
import jax
import jax.numpy as jnp
from jax.experimental import pallas as pl
from jax.experimental.pallas import tpu as pltpu

C_BLUR = 3                      # images_blur channels (RGB)
C_EDGE = 1                      # edge map channels
C_IN = C_BLUR + C_EDGE
C_HID = 32                      # generator stub hidden width
C_OUT = 3                       # generator output channels (RGB)
K = 3                           # 3x3 conv
N_TAPS = K * K                  # 9
PATCH_ROWS = (N_TAPS + 1) * C_IN   # 40: padded to an even number of taps
N_PAIRS = PATCH_ROWS // (2 * C_IN)  # 5 full-(8,128)-tile stores


def _round_up(x, m):
    return (x + m - 1) // m * m


def _choose_tiles(H, W):
    """Pick TH (rows per main tile) and RH (rows per halo band)."""
    PATCH_BUDGET = 8 << 20                      # bf16 patch scratch budget
    if 2 * PATCH_ROWS * H * W <= PATCH_BUDGET:
        return H, H                             # whole image in one tile
    TH = None
    for d in range(H, 0, -1):                   # largest divisor under budget
        if H % d:
            continue
        if 2 * PATCH_ROWS * d * W > PATCH_BUDGET:
            continue
        if (d * W) % 128 == 0:
            TH = d
            break
    if TH is None:
        # TODO(synk): ragged/odd shapes fall back to a whole-image tile.
        return H, H
    RH = TH
    for d in range(1, TH + 1):                  # smallest lane-aligned band
        if TH % d == 0 and (d * W) % 128 == 0:
            RH = d
            break
    return TH, RH


def _vmem_limit_bytes(H, W, TH, RH):
    TW, BW = TH * W, RH * W
    S0 = _round_up(W + 1, 128)
    L = _round_up(S0 + (TH + 1) * W + 1, 128)
    blocks = 4 * (C_BLUR + C_EDGE) * TW          # current blur+edge bands (f32)
    blocks += 4 * 2 * (C_BLUR + C_EDGE) * BW     # prev+next halo bands
    blocks += 4 * C_OUT * TW                     # output block
    scratch = 4 * C_IN * L + 2 * PATCH_ROWS * TW
    est = 2 * blocks + scratch + (4 << 20)       # double-buffered I/O + slack
    return int(min(max(3 * est, 32 << 20), 64 << 20))


def _make_kernel(W, TH, RH, n_row_tiles):
    TW = TH * W
    S0 = _round_up(W + 1, 128)                   # lane-aligned start of main region

    def kernel(blur_prev, blur_cur, blur_next,
               edge_prev, edge_cur, edge_next,
               w1_ref, b1_ref, w2_ref, b2_ref,
               out_ref, pad_ref, patch_ref):
        t = pl.program_id(1)

        # ---- 1) channel concat + halo, entirely in VMEM --------------------
        # Only the two guard lanes are zeroed (they are read at masked taps
        # only); everything else in the read span is written every step.
        zero_col = jnp.zeros((C_IN, 1), jnp.float32)
        pad_ref[:, S0 - W - 1:S0 - W] = zero_col                       # left guard
        pad_ref[:, S0 + (TH + 1) * W:S0 + (TH + 1) * W + 1] = zero_col  # right guard

        # torch.cat((images_blur, edges), dim=1): blur -> rows 0..2, edge -> 3.
        pad_ref[0:C_BLUR, S0:S0 + TW] = blur_cur[0]
        pad_ref[C_BLUR:C_IN, S0:S0 + TW] = edge_cur[0]

        # Vertical halo rows: neighbor data, or zero at the global boundary.
        top_ok = t > 0
        bot_ok = t < n_row_tiles - 1
        above_b = blur_prev[0, :, (RH - 1) * W:RH * W]
        above_e = edge_prev[0, :, (RH - 1) * W:RH * W]
        below_b = blur_next[0, :, 0:W]
        below_e = edge_next[0, :, 0:W]
        pad_ref[0:C_BLUR, S0 - W:S0] = jnp.where(top_ok, above_b, 0.0)
        pad_ref[C_BLUR:C_IN, S0 - W:S0] = jnp.where(top_ok, above_e, 0.0)
        pad_ref[0:C_BLUR, S0 + TW:S0 + TW + W] = jnp.where(bot_ok, below_b, 0.0)
        pad_ref[C_BLUR:C_IN, S0 + TW:S0 + TW + W] = jnp.where(bot_ok, below_e, 0.0)

        # ---- 2) im2col: 9 lane-shifted windows -> (40, TW) bf16 patches ----
        # Masks hoisted once (no per-tap broadcast re-emission).
        col = jax.lax.broadcasted_iota(jnp.int32, (C_IN, TW), 1) % W
        not_left = col != 0
        not_right = col != (W - 1)

        def window(tap):
            ky, kx = tap // K, tap % K
            start = S0 + (ky - 1) * W + (kx - 1)          # static lane offset
            win = pad_ref[:, start:start + TW]            # (C_IN, TW) f32
            if kx == 0:
                win = jnp.where(not_left, win, 0.0)
            elif kx == K - 1:
                win = jnp.where(not_right, win, 0.0)
            return win.astype(jnp.bfloat16)

        # Two taps per store -> 8 sublanes -> full-tile (unmasked) vst.
        for p in range(N_PAIRS):
            a, b = 2 * p, 2 * p + 1
            win_a = window(a)
            win_b = (window(b) if b < N_TAPS
                     else jnp.zeros((C_IN, TW), jnp.bfloat16))
            patch_ref[p * 2 * C_IN:(p + 1) * 2 * C_IN, :] = jnp.concatenate(
                [win_a, win_b], axis=0)

        # ---- 3) 3x3 conv as ONE K=40 bf16 MXU matmul, bias + ReLU -----------
        h = jnp.dot(w1_ref[...], patch_ref[...],
                    preferred_element_type=jnp.float32)   # (C_HID, TW) f32
        h = jnp.maximum(h + b1_ref[...], 0.0)

        # ---- 4) 1x1 conv + sigmoid, lane-dense store -------------------------
        y = jnp.dot(w2_ref[...], h.astype(jnp.bfloat16),
                    preferred_element_type=jnp.float32) + b2_ref[...]
        out_ref[0] = jax.nn.sigmoid(y).astype(out_ref.dtype)   # (C_OUT, TW)

    return kernel


@jax.jit
def r_model_forward(edges, images_blur, params):
    """edges: [N,1,H,W] f32, images_blur: [N,3,H,W] f32 -> [N,3,H,W] f32."""
    w1f, b1, w2, b2 = params
    N, _, H, W = images_blur.shape
    HW = H * W

    TH, RH = _choose_tiles(H, W)
    n_row_tiles = H // TH
    TW, BW = TH * W, RH * W
    S0 = _round_up(W + 1, 128)
    L = _round_up(S0 + (TH + 1) * W + 1, 128)

    # NCHW -> (N, C, H*W): free contiguous reshape (no transpose / pad /
    # extra HBM pass); the halo is built inside the kernel.
    blur_flat = images_blur.reshape(N, C_BLUR, HW)
    edge_flat = edges.reshape(N, C_EDGE, HW)

    # Index maps for the vertical-halo neighbor bands (clamped at the edges;
    # the clamped values are never used because those halos are zeroed).
    tpr = TH // RH                 # halo bands per row tile
    nb = H // RH                   # number of halo bands
    if n_row_tiles == 1:
        prev_map = lambda n, t: (n, 0, 0)
        next_map = lambda n, t: (n, 0, 0)
    else:
        prev_map = lambda n, t: (n, 0, jnp.maximum(t * tpr - 1, 0))
        next_map = lambda n, t: (n, 0, jnp.minimum((t + 1) * tpr, nb - 1))
    cur_map = lambda n, t: (n, 0, t)
    w_map = lambda n, t: (0, 0)

    out_flat = pl.pallas_call(
        _make_kernel(W, TH, RH, n_row_tiles),
        out_shape=jax.ShapeDtypeStruct((N, C_OUT, HW), jnp.float32),
        grid_spec=pltpu.PrefetchScalarGridSpec(
            num_scalar_prefetch=0,
            grid=(N, n_row_tiles),
            in_specs=[
                pl.BlockSpec((1, C_BLUR, BW), prev_map),   # blur band above
                pl.BlockSpec((1, C_BLUR, TW), cur_map),    # blur main band
                pl.BlockSpec((1, C_BLUR, BW), next_map),   # blur band below
                pl.BlockSpec((1, C_EDGE, BW), prev_map),   # edge band above
                pl.BlockSpec((1, C_EDGE, TW), cur_map),    # edge main band
                pl.BlockSpec((1, C_EDGE, BW), next_map),   # edge band below
                pl.BlockSpec((C_HID, PATCH_ROWS), w_map),  # w1 (bf16, padded)
                pl.BlockSpec((C_HID, 1), w_map),           # b1 (f32)
                pl.BlockSpec((C_OUT, C_HID), w_map),       # w2 (bf16)
                pl.BlockSpec((C_OUT, 1), w_map),           # b2 (f32)
            ],
            out_specs=pl.BlockSpec((1, C_OUT, TW), cur_map),
            scratch_shapes=[
                pltpu.VMEM((C_IN, L), jnp.float32),          # halo scratch
                pltpu.VMEM((PATCH_ROWS, TW), jnp.bfloat16),  # im2col patches
            ],
        ),
        compiler_params=pltpu.CompilerParams(
            dimension_semantics=("parallel", "parallel"),
            vmem_limit_bytes=_vmem_limit_bytes(H, W, TH, RH),
        ),
    )(blur_flat, blur_flat, blur_flat,
      edge_flat, edge_flat, edge_flat,
      w1f, b1, w2, b2)

    # (N, C_OUT, H*W) -> NCHW is again a free contiguous reshape.
    return out_flat.reshape(N, C_OUT, H, W)


def init_params(key):
    """Stand-in generator params in PyTorch OIHW layout (f32)."""
    k1, k2, k3, k4 = jax.random.split(key, 4)
    w1 = jax.random.normal(k1, (C_HID, C_IN, K, K), jnp.float32) * 0.1
    b1 = jax.random.normal(k2, (C_HID,), jnp.float32) * 0.1
    w2 = jax.random.normal(k3, (C_OUT, C_HID), jnp.float32) * 0.1
    b2 = jax.random.normal(k4, (C_OUT,), jnp.float32) * 0.1
    return (w1, b1, w2, b2)


def pack_params(torch_params):
    """OIHW conv params -> kernel layout (bf16 im2col weight padded to 40 cols,
    column-vector f32 biases). w1f[co, tap*C_IN + ci] = w1[co, ci, ky, kx]."""
    w1, b1, w2, b2 = torch_params
    w1f = jnp.transpose(w1, (0, 2, 3, 1)).reshape(C_HID, N_TAPS * C_IN)
    w1f = jnp.concatenate(
        [w1f, jnp.zeros((C_HID, PATCH_ROWS - N_TAPS * C_IN), w1f.dtype)], axis=1)
    return (w1f.astype(jnp.bfloat16), b1.reshape(C_HID, 1),
            w2.astype(jnp.bfloat16), b2.reshape(C_OUT, 1))


def reference_forward(edges, images_blur, torch_params):
    """Pure-XLA f32 reference of the same stand-in generator (validation)."""
    w1, b1, w2, b2 = torch_params
    x = jnp.concatenate([images_blur, edges], axis=1)        # cat(blur, edge)
    h = jax.lax.conv_general_dilated(
        x, w1, window_strides=(1, 1), padding="SAME",
        dimension_numbers=("NCHW", "OIHW", "NCHW"))
    h = jnp.maximum(h + b1[None, :, None, None], 0.0)
    y = jnp.einsum("oc,nchw->nohw", w2, h) + b2[None, :, None, None]
    return jax.nn.sigmoid(y)


if __name__ == "__main__":
    key = jax.random.PRNGKey(0)
    k_params, k_blur, k_edge = jax.random.split(key, 3)

    N, H, W = 2, 16, 16
    images_blur = jax.random.uniform(k_blur, (N, C_BLUR, H, W), jnp.float32)
    edges = jax.random.uniform(k_edge, (N, C_EDGE, H, W), jnp.float32)

    torch_params = init_params(k_params)
    params = pack_params(torch_params)

    out = r_model_forward(edges, images_blur, params)
    out = jax.block_until_ready(out)

    assert out.shape == (N, C_OUT, H, W), out.shape
    assert bool(jnp.all(jnp.isfinite(out)))

    # bf16 weights/patches vs f32 reference -> loosened tolerance.
    ref = reference_forward(edges, images_blur, torch_params)
    max_err = float(jnp.max(jnp.abs(out - ref)))
    assert max_err < 2e-2, max_err

    print("KERNEL_OK")
</pallas_src>

<mosaic_0001>
module attributes {stable_mosaic.version = 11 : i64} {
  func.func @kernel(%arg0: i32, %arg1: i32, %arg2: memref<1x3x256xf32, #tpu.memory_space<vmem>>, %arg3: memref<1x3x256xf32, #tpu.memory_space<vmem>>, %arg4: memref<1x3x256xf32, #tpu.memory_space<vmem>>, %arg5: memref<1x1x256xf32, #tpu.memory_space<vmem>>, %arg6: memref<1x1x256xf32, #tpu.memory_space<vmem>>, %arg7: memref<1x1x256xf32, #tpu.memory_space<vmem>>, %arg8: memref<32x40xbf16, #tpu.memory_space<vmem>>, %arg9: memref<32x1xf32, #tpu.memory_space<vmem>>, %arg10: memref<3x32xbf16, #tpu.memory_space<vmem>>, %arg11: memref<3x1xf32, #tpu.memory_space<vmem>>, %arg12: memref<1x3x256xf32, #tpu.memory_space<vmem>>, %arg13: memref<4x512xf32, #tpu.memory_space<vmem>>, %arg14: memref<40x256xbf16, #tpu.memory_space<vmem>>) attributes {dimension_semantics = [#tpu.dimension_semantics<parallel>, #tpu.dimension_semantics<parallel>], iteration_bounds = array<i64: 2, 1>, scalar_prefetch = 0 : i64, scratch_operands = 2 : i64, tpu.core_type = #tpu.core_type<tc>, window_params = [{transform_indices = @transform_0, window_bounds = array<i64: 1, 3, 256>}, {transform_indices = @transform_1, window_bounds = array<i64: 1, 3, 256>}, {transform_indices = @transform_2, window_bounds = array<i64: 1, 3, 256>}, {transform_indices = @transform_3, window_bounds = array<i64: 1, 1, 256>}, {transform_indices = @transform_4, window_bounds = array<i64: 1, 1, 256>}, {transform_indices = @transform_5, window_bounds = array<i64: 1, 1, 256>}, {pipeline_mode = #tpu.pipeline_mode<synchronous>, transform_indices = @transform_6, window_bounds = array<i64: 32, 40>}, {pipeline_mode = #tpu.pipeline_mode<synchronous>, transform_indices = @transform_7, window_bounds = array<i64: 32, 1>}, {pipeline_mode = #tpu.pipeline_mode<synchronous>, transform_indices = @transform_8, window_bounds = array<i64: 3, 32>}, {pipeline_mode = #tpu.pipeline_mode<synchronous>, transform_indices = @transform_9, window_bounds = array<i64: 3, 1>}, {transform_indices = @transform_10, window_bounds = array<i64: 1, 3, 256>}]} {
    %cst = arith.constant 0.000000e+00 : f32
    %0 = vector.broadcast %cst : f32 to vector<4x1xf32>
    %c0 = arith.constant 0 : index
    %c111 = arith.constant 111 : index
    %1 = vector.load %arg13[%c0, %c111] : memref<4x512xf32, #tpu.memory_space<vmem>>, vector<4x1xf32>
    tpu.vector_store %arg13[%c0, %c111], %0 {strides = array<i32>} : memref<4x512xf32, #tpu.memory_space<vmem>>, vector<4x1xf32>,
    %c0_0 = arith.constant 0 : index
    %c400 = arith.constant 400 : index
    %2 = vector.load %arg13[%c0_0, %c400] : memref<4x512xf32, #tpu.memory_space<vmem>>, vector<4x1xf32>
    tpu.vector_store %arg13[%c0_0, %c400], %0 {strides = array<i32>} : memref<4x512xf32, #tpu.memory_space<vmem>>, vector<4x1xf32>,
    %c0_1 = arith.constant 0 : index
    %c0_2 = arith.constant 0 : index
    %c0_3 = arith.constant 0 : index
    %3 = vector.load %arg3[%c0_1, %c0_2, %c0_3] : memref<1x3x256xf32, #tpu.memory_space<vmem>>, vector<1x3x256xf32>
    %4 = vector.shape_cast %3 : vector<1x3x256xf32> to vector<3x256xf32>
    %c0_4 = arith.constant 0 : index
    %c128 = arith.constant 128 : index
    %5 = vector.load %arg13[%c0_4, %c128] : memref<4x512xf32, #tpu.memory_space<vmem>>, vector<3x256xf32>
    tpu.vector_store %arg13[%c0_4, %c128], %4 {strides = array<i32>} : memref<4x512xf32, #tpu.memory_space<vmem>>, vector<3x256xf32>,
    %c0_5 = arith.constant 0 : index
    %c0_6 = arith.constant 0 : index
    %c0_7 = arith.constant 0 : index
    %6 = vector.load %arg6[%c0_5, %c0_6, %c0_7] : memref<1x1x256xf32, #tpu.memory_space<vmem>>, vector<1x1x256xf32>
    %7 = vector.shape_cast %6 : vector<1x1x256xf32> to vector<1x256xf32>
    %c3 = arith.constant 3 : index
    %c128_8 = arith.constant 128 : index
    %8 = vector.load %arg13[%c3, %c128_8] : memref<4x512xf32, #tpu.memory_space<vmem>>, vector<1x256xf32>
    tpu.vector_store %arg13[%c3, %c128_8], %7 {strides = array<i32>} : memref<4x512xf32, #tpu.memory_space<vmem>>, vector<1x256xf32>,
    %c0_i32 = arith.constant 0 : i32
    %9 = arith.cmpi sgt, %arg1, %c0_i32 : i32
    %c0_i32_9 = arith.constant 0 : i32
    %10 = arith.cmpi slt, %arg1, %c0_i32_9 : i32
    %c0_10 = arith.constant 0 : index
    %c0_11 = arith.constant 0 : index
    %c240 = arith.constant 240 : index
    %11 = vector.load %arg2[%c0_10, %c0_11, %c240] : memref<1x3x256xf32, #tpu.memory_space<vmem>>, vector<1x3x16xf32>
    %12 = vector.shape_cast %11 : vector<1x3x16xf32> to vector<3x16xf32>
    %c0_12 = arith.constant 0 : index
    %c0_13 = arith.constant 0 : index
    %c240_14 = arith.constant 240 : index
    %13 = vector.load %arg5[%c0_12, %c0_13, %c240_14] : memref<1x1x256xf32, #tpu.memory_space<vmem>>, vector<1x1x16xf32>
    %14 = vector.shape_cast %13 : vector<1x1x16xf32> to vector<1x16xf32>
    %c0_15 = arith.constant 0 : index
    %c0_16 = arith.constant 0 : index
    %c0_17 = arith.constant 0 : index
    %15 = vector.load %arg4[%c0_15, %c0_16, %c0_17] : memref<1x3x256xf32, #tpu.memory_space<vmem>>, vector<1x3x16xf32>
    %16 = vector.shape_cast %15 : vector<1x3x16xf32> to vector<3x16xf32>
    %c0_18 = arith.constant 0 : index
    %c0_19 = arith.constant 0 : index
    %c0_20 = arith.constant 0 : index
    %17 = vector.load %arg7[%c0_18, %c0_19, %c0_20] : memref<1x1x256xf32, #tpu.memory_space<vmem>>, vector<1x1x16xf32>
    %18 = vector.shape_cast %17 : vector<1x1x16xf32> to vector<1x16xf32>
    %cst_21 = arith.constant 0.000000e+00 : f32
    %19 = vector.broadcast %cst_21 : f32 to vector<3x16xf32>
    %20 = arith.select %9, %12, %19 : vector<3x16xf32>
    %c0_22 = arith.constant 0 : index
    %c112 = arith.constant 112 : index
    %21 = vector.load %arg13[%c0_22, %c112] : memref<4x512xf32, #tpu.memory_space<vmem>>, vector<3x16xf32>
    tpu.vector_store %arg13[%c0_22, %c112], %20 {strides = array<i32>} : memref<4x512xf32, #tpu.memory_space<vmem>>, vector<3x16xf32>,
    %cst_23 = arith.constant 0.000000e+00 : f32
    %22 = vector.broadcast %cst_23 : f32 to vector<1x16xf32>
    %23 = arith.select %9, %14, %22 : vector<1x16xf32>
    %c3_24 = arith.constant 3 : index
    %c112_25 = arith.constant 112 : index
    %24 = vector.load %arg13[%c3_24, %c112_25] : memref<4x512xf32, #tpu.memory_space<vmem>>, vector<1x16xf32>
    tpu.vector_store %arg13[%c3_24, %c112_25], %23 {strides = array<i32>} : memref<4x512xf32, #tpu.memory_space<vmem>>, vector<1x16xf32>,
    %cst_26 = arith.constant 0.000000e+00 : f32
    %25 = vector.broadcast %cst_26 : f32 to vector<3x16xf32>
    %26 = arith.select %10, %16, %25 : vector<3x16xf32>
    %c0_27 = arith.constant 0 : index
    %c384 = arith.constant 384 : index
    %27 = vector.load %arg13[%c0_27, %c384] : memref<4x512xf32, #tpu.memory_space<vmem>>, vector<3x16xf32>
    tpu.vector_store %arg13[%c0_27, %c384], %26 {strides = array<i32>} : memref<4x512xf32, #tpu.memory_space<vmem>>, vector<3x16xf32>,
    %cst_28 = arith.constant 0.000000e+00 : f32
    %28 = vector.broadcast %cst_28 : f32 to vector<1x16xf32>
    %29 = arith.select %10, %18, %28 : vector<1x16xf32>
    %c3_29 = arith.constant 3 : index
    %c384_30 = arith.constant 384 : index
    %30 = vector.load %arg13[%c3_29, %c384_30] : memref<4x512xf32, #tpu.memory_space<vmem>>, vector<1x16xf32>
    tpu.vector_store %arg13[%c3_29, %c384_30], %29 {strides = array<i32>} : memref<4x512xf32, #tpu.memory_space<vmem>>, vector<1x16xf32>,
    %31 = tpu.iota {dimensions = array<i32: 1>} : vector<4x256xi32>
    %c16_i32 = arith.constant 16 : i32
    %c0_i32_31 = arith.constant 0 : i32
    %32 = arith.cmpi eq, %c16_i32, %c0_i32_31 : i32
    %c1_i32 = arith.constant 1 : i32
    %33 = arith.select %32, %c1_i32, %c16_i32 : i32
    %34 = vector.broadcast %33 : i32 to vector<4x256xi32>
    %35 = arith.remsi %31, %34 : vector<4x256xi32>
    %c0_i32_32 = arith.constant 0 : i32
    %36 = vector.broadcast %c0_i32_32 : i32 to vector<4x256xi32>
    %37 = arith.cmpi ne, %35, %36 : vector<4x256xi32>
    %c0_i32_33 = arith.constant 0 : i32
    %38 = vector.broadcast %c0_i32_33 : i32 to vector<4x256xi32>
    %39 = arith.cmpi slt, %35, %38 : vector<4x256xi32>
    %c0_i32_34 = arith.constant 0 : i32
    %40 = arith.cmpi slt, %33, %c0_i32_34 : i32
    %41 = vector.broadcast %40 : i1 to vector<4x256xi1>
    %42 = vector.broadcast %41 : vector<4x256xi1> to vector<4x256xi1>
    %43 = arith.xori %39, %42 : vector<4x256xi1>
    %44 = arith.andi %43, %37 : vector<4x256xi1>
    %45 = vector.broadcast %33 : i32 to vector<4x256xi32>
    %46 = arith.addi %35, %45 : vector<4x256xi32>
    %47 = arith.select %44, %46, %35 : vector<4x256xi1>, vector<4x256xi32>
    %c0_i32_35 = arith.constant 0 : i32
    %48 = vector.broadcast %c0_i32_35 : i32 to vector<4x256xi32>
    %49 = arith.cmpi ne, %47, %48 : vector<4x256xi32>
    %c15_i32 = arith.constant 15 : i32
    %50 = vector.broadcast %c15_i32 : i32 to vector<4x256xi32>
    %51 = arith.cmpi ne, %47, %50 : vector<4x256xi32>
    %c0_36 = arith.constant 0 : index
    %c111_37 = arith.constant 111 : index
    %52 = vector.load %arg13[%c0_36, %c111_37] : memref<4x512xf32, #tpu.memory_space<vmem>>, vector<4x256xf32>
    %cst_38 = arith.constant 0.000000e+00 : f32
    %53 = vector.broadcast %cst_38 : f32 to vector<4x256xf32>
    %54 = arith.select %49, %52, %53 : vector<4x256xi1>, vector<4x256xf32>
    %55 = arith.truncf %54 : vector<4x256xf32> to vector<4x256xbf16>
    %c0_39 = arith.constant 0 : index
    %c112_40 = arith.constant 112 : index
    %56 = vector.load %arg13[%c0_39, %c112_40] : memref<4x512xf32, #tpu.memory_space<vmem>>, vector<4x256xf32>
    %57 = arith.truncf %56 : vector<4x256xf32> to vector<4x256xbf16>
    %58 = tpu.concatenate %55, %57 in 0 : vector<4x256xbf16>, vector<4x256xbf16> -> vector<8x256xbf16>
    %c0_41 = arith.constant 0 : index
    %c0_42 = arith.constant 0 : index
    %59 = vector.load %arg14[%c0_41, %c0_42] : memref<40x256xbf16, #tpu.memory_space<vmem>>, vector<8x256xbf16>
    tpu.vector_store %arg14[%c0_41, %c0_42], %58 {strides = array<i32>} : memref<40x256xbf16, #tpu.memory_space<vmem>>, vector<8x256xbf16>,
    %c0_43 = arith.constant 0 : index
    %c113 = arith.constant 113 : index
    %60 = vector.load %arg13[%c0_43, %c113] : memref<4x512xf32, #tpu.memory_space<vmem>>, vector<4x256xf32>
    %cst_44 = arith.constant 0.000000e+00 : f32
    %61 = vector.broadcast %cst_44 : f32 to vector<4x256xf32>
    %62 = arith.select %51, %60, %61 : vector<4x256xi1>, vector<4x256xf32>
    %63 = arith.truncf %62 : vector<4x256xf32> to vector<4x256xbf16>
    %c0_45 = arith.constant 0 : index
    %c127 = arith.constant 127 : index
    %64 = vector.load %arg13[%c0_45, %c127] : memref<4x512xf32, #tpu.memory_space<vmem>>, vector<4x256xf32>
    %cst_46 = arith.constant 0.000000e+00 : f32
    %65 = vector.broadcast %cst_46 : f32 to vector<4x256xf32>
    %66 = arith.select %49, %64, %65 : vector<4x256xi1>, vector<4x256xf32>
    %67 = arith.truncf %66 : vector<4x256xf32> to vector<4x256xbf16>
    %68 = tpu.concatenate %63, %67 in 0 : vector<4x256xbf16>, vector<4x256xbf16> -> vector<8x256xbf16>
    %c8 = arith.constant 8 : index
    %c0_47 = arith.constant 0 : index
    %69 = vector.load %arg14[%c8, %c0_47] : memref<40x256xbf16, #tpu.memory_space<vmem>>, vector<8x256xbf16>
    tpu.vector_store %arg14[%c8, %c0_47], %68 {strides = array<i32>} : memref<40x256xbf16, #tpu.memory_space<vmem>>, vector<8x256xbf16>,
    %c0_48 = arith.constant 0 : index
    %c128_49 = arith.constant 128 : index
    %70 = vector.load %arg13[%c0_48, %c128_49] : memref<4x512xf32, #tpu.memory_space<vmem>>, vector<4x256xf32>
    %71 = arith.truncf %70 : vector<4x256xf32> to vector<4x256xbf16>
    %c0_50 = arith.constant 0 : index
    %c129 = arith.constant 129 : index
    %72 = vector.load %arg13[%c0_50, %c129] : memref<4x512xf32, #tpu.memory_space<vmem>>, vector<4x256xf32>
    %cst_51 = arith.constant 0.000000e+00 : f32
    %73 = vector.broadcast %cst_51 : f32 to vector<4x256xf32>
    %74 = arith.select %51, %72, %73 : vector<4x256xi1>, vector<4x256xf32>
    %75 = arith.truncf %74 : vector<4x256xf32> to vector<4x256xbf16>
    %76 = tpu.concatenate %71, %75 in 0 : vector<4x256xbf16>, vector<4x256xbf16> -> vector<8x256xbf16>
    %c16 = arith.constant 16 : index
    %c0_52 = arith.constant 0 : index
    %77 = vector.load %arg14[%c16, %c0_52] : memref<40x256xbf16, #tpu.memory_space<vmem>>, vector<8x256xbf16>
    tpu.vector_store %arg14[%c16, %c0_52], %76 {strides = array<i32>} : memref<40x256xbf16, #tpu.memory_space<vmem>>, vector<8x256xbf16>,
    %c0_53 = arith.constant 0 : index
    %c143 = arith.constant 143 : index
    %78 = vector.load %arg13[%c0_53, %c143] : memref<4x512xf32, #tpu.memory_space<vmem>>, vector<4x256xf32>
    %cst_54 = arith.constant 0.000000e+00 : f32
    %79 = vector.broadcast %cst_54 : f32 to vector<4x256xf32>
    %80 = arith.select %49, %78, %79 : vector<4x256xi1>, vector<4x256xf32>
    %81 = arith.truncf %80 : vector<4x256xf32> to vector<4x256xbf16>
    %c0_55 = arith.constant 0 : index
    %c144 = arith.constant 144 : index
    %82 = vector.load %arg13[%c0_55, %c144] : memref<4x512xf32, #tpu.memory_space<vmem>>, vector<4x256xf32>
    %83 = arith.truncf %82 : vector<4x256xf32> to vector<4x256xbf16>
    %84 = tpu.concatenate %81, %83 in 0 : vector<4x256xbf16>, vector<4x256xbf16> -> vector<8x256xbf16>
    %c24 = arith.constant 24 : index
    %c0_56 = arith.constant 0 : index
    %85 = vector.load %arg14[%c24, %c0_56] : memref<40x256xbf16, #tpu.memory_space<vmem>>, vector<8x256xbf16>
    tpu.vector_store %arg14[%c24, %c0_56], %84 {strides = array<i32>} : memref<40x256xbf16, #tpu.memory_space<vmem>>, vector<8x256xbf16>,
    %c0_57 = arith.constant 0 : index
    %c145 = arith.constant 145 : index
    %86 = vector.load %arg13[%c0_57, %c145] : memref<4x512xf32, #tpu.memory_space<vmem>>, vector<4x256xf32>
    %cst_58 = arith.constant 0.000000e+00 : f32
    %87 = vector.broadcast %cst_58 : f32 to vector<4x256xf32>
    %88 = arith.select %51, %86, %87 : vector<4x256xi1>, vector<4x256xf32>
    %89 = arith.truncf %88 : vector<4x256xf32> to vector<4x256xbf16>
    %cst_59 = arith.constant 0.000000e+00 : bf16
    %90 = vector.broadcast %cst_59 : bf16 to vector<4x256xbf16>
    %91 = tpu.concatenate %89, %90 in 0 : vector<4x256xbf16>, vector<4x256xbf16> -> vector<8x256xbf16>
    %c32 = arith.constant 32 : index
    %c0_60 = arith.constant 0 : index
    %92 = vector.load %arg14[%c32, %c0_60] : memref<40x256xbf16, #tpu.memory_space<vmem>>, vector<8x256xbf16>
    tpu.vector_store %arg14[%c32, %c0_60], %91 {strides = array<i32>} : memref<40x256xbf16, #tpu.memory_space<vmem>>, vector<8x256xbf16>,
    %c0_61 = arith.constant 0 : index
    %c0_62 = arith.constant 0 : index
    %93 = vector.load %arg8[%c0_61, %c0_62] : memref<32x40xbf16, #tpu.memory_space<vmem>>, vector<32x40xbf16>
    %c0_63 = arith.constant 0 : index
    %c0_64 = arith.constant 0 : index
    %94 = vector.load %arg14[%c0_63, %c0_64] : memref<40x256xbf16, #tpu.memory_space<vmem>>, vector<40x256xbf16>
    %cst_65 = arith.constant dense<0.000000e+00> : vector<32x256xf32>
    %95 = tpu.matmul %93, %94, %cst_65 {dimension_numbers = #tpu.dot_dimension_numbers<[1], [0], [0], [1], [0, 0, 1, 1], [], []>} : vector<32x40xbf16>, vector<40x256xbf16>, vector<32x256xf32> -> vector<32x256xf32>
    %c0_66 = arith.constant 0 : index
    %c0_67 = arith.constant 0 : index
    %96 = vector.load %arg9[%c0_66, %c0_67] : memref<32x1xf32, #tpu.memory_space<vmem>>, vector<32x1xf32>
    %97 = vector.broadcast %96 : vector<32x1xf32> to vector<32x256xf32>
    %98 = arith.addf %95, %97 : vector<32x256xf32>
    %cst_68 = arith.constant 0.000000e+00 : f32
    %99 = vector.broadcast %cst_68 : f32 to vector<32x256xf32>
    %100 = arith.maximumf %98, %99 : vector<32x256xf32>
    %c0_69 = arith.constant 0 : index
    %c0_70 = arith.constant 0 : index
    %101 = vector.load %arg10[%c0_69, %c0_70] : memref<3x32xbf16, #tpu.memory_space<vmem>>, vector<3x32xbf16>
    %102 = arith.truncf %100 : vector<32x256xf32> to vector<32x256xbf16>
    %cst_71 = arith.constant dense<0.000000e+00> : vector<3x256xf32>
    %103 = tpu.matmul %101, %102, %cst_71 {dimension_numbers = #tpu.dot_dimension_numbers<[1], [0], [0], [1], [0, 0, 1, 1], [], []>} : vector<3x32xbf16>, vector<32x256xbf16>, vector<3x256xf32> -> vector<3x256xf32>
    %c0_72 = arith.constant 0 : index
    %c0_73 = arith.constant 0 : index
    %104 = vector.load %arg11[%c0_72, %c0_73] : memref<3x1xf32, #tpu.memory_space<vmem>>, vector<3x1xf32>
    %105 = vector.broadcast %104 : vector<3x1xf32> to vector<3x256xf32>
    %106 = arith.addf %103, %105 : vector<3x256xf32>
    %107 = arith.negf %106 : vector<3x256xf32>
    %108 = math.exp %107 : vector<3x256xf32>
    %cst_74 = arith.constant 1.000000e+00 : f32
    %109 = vector.broadcast %cst_74 : f32 to vector<3x256xf32>
    %110 = arith.addf %109, %108 : vector<3x256xf32>
    %111 = arith.divf %109, %110 : vector<3x256xf32>
    %c0_75 = arith.constant 0 : index
    %c0_76 = arith.constant 0 : index
    %c0_77 = arith.constant 0 : index
    %112 = vector.load %arg12[%c0_75, %c0_76, %c0_77] : memref<1x3x256xf32, #tpu.memory_space<vmem>>, vector<1x3x256xf32>
    %113 = vector.shape_cast %112 : vector<1x3x256xf32> to vector<3x256xf32>
    %114 = vector.shape_cast %111 : vector<3x256xf32> to vector<1x3x256xf32>
    tpu.vector_store %arg12[%c0_75, %c0_76, %c0_77], %114 {strides = array<i32>} : memref<1x3x256xf32, #tpu.memory_space<vmem>>, vector<1x3x256xf32>,
    return
  }
  func.func @transform_0(%arg0: i32, %arg1: i32) -> (i32, i32, i32) {
    %c0_i32 = arith.constant 0 : i32
    %c0_i32_0 = arith.constant 0 : i32
    %c0_i32_1 = arith.constant 0 : i32
    return %arg0, %c0_i32, %c0_i32_0 : i32, i32, i32
  }
  func.func @transform_1(%arg0: i32, %arg1: i32) -> (i32, i32, i32) {
    %c0_i32 = arith.constant 0 : i32
    %c0_i32_0 = arith.constant 0 : i32
    return %arg0, %c0_i32, %arg1 : i32, i32, i32
  }
  func.func @transform_2(%arg0: i32, %arg1: i32) -> (i32, i32, i32) {
    %c0_i32 = arith.constant 0 : i32
    %c0_i32_0 = arith.constant 0 : i32
    %c0_i32_1 = arith.constant 0 : i32
    return %arg0, %c0_i32, %c0_i32_0 : i32, i32, i32
  }
  func.func @transform_3(%arg0: i32, %arg1: i32) -> (i32, i32, i32) {
    %c0_i32 = arith.constant 0 : i32
    %c0_i32_0 = arith.constant 0 : i32
    %c0_i32_1 = arith.constant 0 : i32
    return %arg0, %c0_i32, %c0_i32_0 : i32, i32, i32
  }
  func.func @transform_4(%arg0: i32, %arg1: i32) -> (i32, i32, i32) {
    %c0_i32 = arith.constant 0 : i32
    %c0_i32_0 = arith.constant 0 : i32
    return %arg0, %c0_i32, %arg1 : i32, i32, i32
  }
  func.func @transform_5(%arg0: i32, %arg1: i32) -> (i32, i32, i32) {
    %c0_i32 = arith.constant 0 : i32
    %c0_i32_0 = arith.constant 0 : i32
    %c0_i32_1 = arith.constant 0 : i32
    return %arg0, %c0_i32, %c0_i32_0 : i32, i32, i32
  }
  func.func @transform_6(%arg0: i32, %arg1: i32) -> (i32, i32) {
    %c0_i32 = arith.constant 0 : i32
    %c0_i32_0 = arith.constant 0 : i32
    %c0_i32_1 = arith.constant 0 : i32
    return %c0_i32, %c0_i32_0 : i32, i32
  }
  func.func @transform_7(%arg0: i32, %arg1: i32) -> (i32, i32) {
    %c0_i32 = arith.constant 0 : i32
    %c0_i32_0 = arith.constant 0 : i32
    %c0_i32_1 = arith.constant 0 : i32
    return %c0_i32, %c0_i32_0 : i32, i32
  }
  func.func @transform_8(%arg0: i32, %arg1: i32) -> (i32, i32) {
    %c0_i32 = arith.constant 0 : i32
    %c0_i32_0 = arith.constant 0 : i32
    %c0_i32_1 = arith.constant 0 : i32
    return %c0_i32, %c0_i32_0 : i32, i32
  }
  func.func @transform_9(%arg0: i32, %arg1: i32) -> (i32, i32) {
    %c0_i32 = arith.constant 0 : i32
    %c0_i32_0 = arith.constant 0 : i32
    %c0_i32_1 = arith.constant 0 : i32
    return %c0_i32, %c0_i32_0 : i32, i32
  }
  func.func @transform_10(%arg0: i32, %arg1: i32) -> (i32, i32, i32) {
    %c0_i32 = arith.constant 0 : i32
    %c0_i32_0 = arith.constant 0 : i32
    return %arg0, %c0_i32, %arg1 : i32, i32, i32
  }
}

</mosaic_0001>

<llo_original>
// kernel: r_model_forward.1
$region0: #{r_model_forward.1}
  #allocation0 [shape = 'u32[]', space=smem, size = 0x4, offset = 0x4, fixed_abs, tag = 'smem constant byte address 0x4 - core index']
  #allocation1 [shape = 'u32[144,128]{1,0:T(1,128)}', space=vmem, size = 0x12000, scoped, tag = 'internal scratch']
  #allocation2 [shape = 'f32[4,512]{1,0:T(4,128)}', space=vmem, size = 0x2000, scoped, tag = 'scratch operand']
  #allocation3 [shape = 'bf16[40,256]{1,0:T(8,128)(2,1)}', space=vmem, size = 0x5000, scoped, tag = 'scratch operand']
  %s0 = inlined_call_operand.vmem [shape: f32[2,3,256], index: 0, kind: input, shape index: {}, may-alias: {0,1,2}]
  %s1 = inlined_call_operand.vmem [shape: f32[2,3,256], index: 1, kind: input, shape index: {}, may-alias: {0,1,2}]
  %s2 = inlined_call_operand.vmem [shape: f32[2,3,256], index: 2, kind: input, shape index: {}, may-alias: {0,1,2}]
  %s3 = inlined_call_operand.vmem [shape: f32[2,1,256], index: 3, kind: input, shape index: {}, may-alias: {3,4,5}]
  %s4 = inlined_call_operand.vmem [shape: f32[2,1,256], index: 4, kind: input, shape index: {}, may-alias: {3,4,5}]
  %s5 = inlined_call_operand.vmem [shape: f32[2,1,256], index: 5, kind: input, shape index: {}, may-alias: {3,4,5}]
  %s6 = inlined_call_operand.vmem [shape: bf16[32,40], index: 6, kind: input, shape index: {}]
  %s7 = inlined_call_operand.vmem [shape: f32[32,1], index: 7, kind: input, shape index: {}]
  %s8 = inlined_call_operand.vmem [shape: bf16[3,32], index: 8, kind: input, shape index: {}]
  %s9 = inlined_call_operand.vmem [shape: f32[3,1], index: 9, kind: input, shape index: {}]
  %s10 = inlined_call_operand.vmem [shape: f32[2,3,256], index: 10, kind: output, shape index: {}]
  %s11 = sld [smem:[#allocation0]]
  $region73: #{r_model_forward.1} parent=0
    _
  %s13 = ssub.s32 1, %s11
  %s14 = scalar_select 0, %s13, %s11
  loop: start=0, step=1, limit=4
  $region2: #{r_model_forward.1} parent=0 // loop_pre_header
    _
  $region3: #{r_model_forward.1} parent=0 // loop_header
    %s16 = sphi 0, %s20
    %p17 = scmp.ge.s32.totalorder %s16, 4
    %s23 = sphi 0, %s35
    %s24 = sphi 0, %s31
    %s25 = sphi 0, %s23
    %s26 = sphi 0, %s24
    %s27 = sphi 0, %s25
    %s28 = sphi 0, %s26
    %s38 = sphi 0, %s40
    %s41 = sphi 0, %s38
    %s42 = sphi 0, %s41
    %s58 = sphi 0, %s42
    %s66 = sphi 0, %s68
    %s69 = sphi 0, %s66
    %s70 = sphi 0, %s69
    %s86 = sphi 0, %s70
    %s92 = sphi 0, %s94
    %s95 = sphi 0, %s92
    %s96 = sphi 0, %s95
    %s112 = sphi 0, %s96
    %s118 = sphi 0, %s120
    %s121 = sphi 0, %s118
    %s122 = sphi 0, %s121
    %s138 = sphi 0, %s122
    %s146 = sphi 0, %s148
    %s149 = sphi 0, %s146
    %s150 = sphi 0, %s149
    %s166 = sphi 0, %s150
    %s172 = sphi 0, %s174
    %s175 = sphi 0, %s172
    %s176 = sphi 0, %s175
    %s192 = sphi 0, %s176
    %s196 = sphi 0, %s196
    %s198 = sphi 0, %s196
    %s199 = sphi 0, %s198
    %s213 = sphi 0, %s199
    %s217 = sphi 0, %s217
    %s219 = sphi 0, %s217
    %s220 = sphi 0, %s219
    %s234 = sphi 0, %s220
    %s238 = sphi 0, %s238
    %s240 = sphi 0, %s238
    %s241 = sphi 0, %s240
    %s255 = sphi 0, %s241
    %s259 = sphi 0, %s259
    %s261 = sphi 0, %s259
    %s262 = sphi 0, %s261
    %s276 = sphi 0, %s262
    %s284 = sphi 0, %s286
    %s287 = sphi 0, %s284
    %s288 = sphi 0, %s287
    %s304 = sphi 0, %s288
  $region4: #{r_model_forward.1} parent=0 // loop_header_branch
    %19 = sbr.rel (%p17) target = $region8
  $region5: #{r_model_forward.1} parent=0 // loop_body
    %s21 = ssub.s32 %s16, 1
    %s22 = ssub.s32 %s16, 2
    %s29 = sadd.s32 1, %s24
    %p30 = scmp.ge.s32.totalorder %s29, 1
    %s31 = scalar_select %p30, 0, %s29
    %s32 = sadd.s32 1, %s23
    %s33 = scalar_select %p30, %s32, %s23
    %p34 = scmp.ge.s32.totalorder %s33, 2
    %s35 = scalar_select %p34, 0, %s33
    %s36 = ssub.s32 %s23, %s35
    %p37 = scmp.eq.s32.totalorder %s36, 0
    %s39 = sadd.s32 %s38, 1
    %s40 = scalar_select %p37, %s38, %s39
    %p43 = pneg %p37
    %p44 = scmp.eq.s32.totalorder %s16, 1
    %p45 = por %p43, %p44
    %p46 = scmp.ne.s32.totalorder %s38, %s41
    %p47 = scmp.eq.s32.totalorder %s16, 0
    %p48 = por %p46, %p47
    %p49 = scmp.ne.s32.totalorder %s38, %s41
    %p50 = scmp.eq.s32.totalorder %s21, 1
    %p51 = por %p49, %p50
    %p52 = scmp.ne.s32.totalorder %s41, %s42
    %p53 = scmp.eq.s32.totalorder %s21, 0
    %p54 = por %p52, %p53
    %p55 = scmp.ne.s32.totalorder %s41, %s42
    %p56 = scmp.eq.s32.totalorder %s22, 1
    %p57 = por %p55, %p56
    %p59 = scmp.ne.s32.totalorder %s42, %s58
    %p60 = scmp.eq.s32.totalorder %s22, 0
    %p61 = por %p59, %p60
    %s62 = ssub.s32 %s23, %s35
    %s63 = ssub.s32 %s24, %s31
    %s64 = sor.u32 %s62, %s63
    %p65 = scmp.eq.s32.totalorder %s64, 0
    %s67 = sadd.s32 %s66, 1
    %s68 = scalar_select %p65, %s66, %s67
    %p71 = pneg %p65
    %p72 = scmp.eq.s32.totalorder %s16, 1
    %p73 = por %p71, %p72
    %p74 = scmp.ne.s32.totalorder %s66, %s69
    %p75 = scmp.eq.s32.totalorder %s16, 0
    %p76 = por %p74, %p75
    %p77 = scmp.ne.s32.totalorder %s66, %s69
    %p78 = scmp.eq.s32.totalorder %s21, 1
    %p79 = por %p77, %p78
    %p80 = scmp.ne.s32.totalorder %s69, %s70
    %p81 = scmp.eq.s32.totalorder %s21, 0
    %p82 = por %p80, %p81
    %p83 = scmp.ne.s32.totalorder %s69, %s70
    %p84 = scmp.eq.s32.totalorder %s22, 1
    %p85 = por %p83, %p84
    %p87 = scmp.ne.s32.totalorder %s70, %s86
    %p88 = scmp.eq.s32.totalorder %s22, 0
    %p89 = por %p87, %p88
    %s90 = ssub.s32 %s23, %s35
    %p91 = scmp.eq.s32.totalorder %s90, 0
    %s93 = sadd.s32 %s92, 1
    %s94 = scalar_select %p91, %s92, %s93
    %p97 = pneg %p91
    %p98 = scmp.eq.s32.totalorder %s16, 1
    %p99 = por %p97, %p98
    %p100 = scmp.ne.s32.totalorder %s92, %s95
    %p101 = scmp.eq.s32.totalorder %s16, 0
    %p102 = por %p100, %p101
    %p103 = scmp.ne.s32.totalorder %s92, %s95
    %p104 = scmp.eq.s32.totalorder %s21, 1
    %p105 = por %p103, %p104
    %p106 = scmp.ne.s32.totalorder %s95, %s96
    %p107 = scmp.eq.s32.totalorder %s21, 0
    %p108 = por %p106, %p107
    %p109 = scmp.ne.s32.totalorder %s95, %s96
    %p110 = scmp.eq.s32.totalorder %s22, 1
    %p111 = por %p109, %p110
    %p113 = scmp.ne.s32.totalorder %s96, %s112
    %p114 = scmp.eq.s32.totalorder %s22, 0
    %p115 = por %p113, %p114
    %s116 = ssub.s32 %s23, %s35
    %p117 = scmp.eq.s32.totalorder %s116, 0
    %s119 = sadd.s32 %s118, 1
    %s120 = scalar_select %p117, %s118, %s119
    %p123 = pneg %p117
    %p124 = scmp.eq.s32.totalorder %s16, 1
    %p125 = por %p123, %p124
    %p126 = scmp.ne.s32.totalorder %s118, %s121
    %p127 = scmp.eq.s32.totalorder %s16, 0
    %p128 = por %p126, %p127
    %p129 = scmp.ne.s32.totalorder %s118, %s121
    %p130 = scmp.eq.s32.totalorder %s21, 1
    %p131 = por %p129, %p130
    %p132 = scmp.ne.s32.totalorder %s121, %s122
    %p133 = scmp.eq.s32.totalorder %s21, 0
    %p134 = por %p132, %p133
    %p135 = scmp.ne.s32.totalorder %s121, %s122
    %p136 = scmp.eq.s32.totalorder %s22, 1
    %p137 = por %p135, %p136
    %p139 = scmp.ne.s32.totalorder %s122, %s138
    %p140 = scmp.eq.s32.totalorder %s22, 0
    %p141 = por %p139, %p140
    %s142 = ssub.s32 %s23, %s35
    %s143 = ssub.s32 %s24, %s31
    %s144 = sor.u32 %s142, %s143
    %p145 = scmp.eq.s32.totalorder %s144, 0
    %s147 = sadd.s32 %s146, 1
    %s148 = scalar_select %p145, %s146, %s147
    %p151 = pneg %p145
    %p152 = scmp.eq.s32.totalorder %s16, 1
    %p153 = por %p151, %p152
    %p154 = scmp.ne.s32.totalorder %s146, %s149
    %p155 = scmp.eq.s32.totalorder %s16, 0
    %p156 = por %p154, %p155
    %p157 = scmp.ne.s32.totalorder %s146, %s149
    %p158 = scmp.eq.s32.totalorder %s21, 1
    %p159 = por %p157, %p158
    %p160 = scmp.ne.s32.totalorder %s149, %s150
    %p161 = scmp.eq.s32.totalorder %s21, 0
    %p162 = por %p160, %p161
    %p163 = scmp.ne.s32.totalorder %s149, %s150
    %p164 = scmp.eq.s32.totalorder %s22, 1
    %p165 = por %p163, %p164
    %p167 = scmp.ne.s32.totalorder %s150, %s166
    %p168 = scmp.eq.s32.totalorder %s22, 0
    %p169 = por %p167, %p168
    %s170 = ssub.s32 %s23, %s35
    %p171 = scmp.eq.s32.totalorder %s170, 0
    %s173 = sadd.s32 %s172, 1
    %s174 = scalar_select %p171, %s172, %s173
    %p177 = pneg %p171
    %p178 = scmp.eq.s32.totalorder %s16, 1
    %p179 = por %p177, %p178
    %p180 = scmp.ne.s32.totalorder %s172, %s175
    %p181 = scmp.eq.s32.totalorder %s16, 0
    %p182 = por %p180, %p181
    %p183 = scmp.ne.s32.totalorder %s172, %s175
    %p184 = scmp.eq.s32.totalorder %s21, 1
    %p185 = por %p183, %p184
    %p186 = scmp.ne.s32.totalorder %s175, %s176
    %p187 = scmp.eq.s32.totalorder %s21, 0
    %p188 = por %p186, %p187
    %p189 = scmp.ne.s32.totalorder %s175, %s176
    %p190 = scmp.eq.s32.totalorder %s22, 1
    %p191 = por %p189, %p190
    %p193 = scmp.ne.s32.totalorder %s176, %s192
    %p194 = scmp.eq.s32.totalorder %s22, 0
    %p195 = por %p193, %p194
    %s197 = sadd.s32 %s196, 1
    %p200 = scmp.eq.s32.totalorder %s16, 1
    %p201 = scmp.ne.s32.totalorder %s196, %s198
    %p202 = scmp.eq.s32.totalorder %s16, 0
    %p203 = por %p201, %p202
    %p204 = scmp.ne.s32.totalorder %s196, %s198
    %p205 = scmp.eq.s32.totalorder %s21, 1
    %p206 = por %p204, %p205
    %p207 = scmp.ne.s32.totalorder %s198, %s199
    %p208 = scmp.eq.s32.totalorder %s21, 0
    %p209 = por %p207, %p208
    %p210 = scmp.ne.s32.totalorder %s198, %s199
    %p211 = scmp.eq.s32.totalorder %s22, 1
    %p212 = por %p210, %p211
    %p214 = scmp.ne.s32.totalorder %s199, %s213
    %p215 = scmp.eq.s32.totalorder %s22, 0
    %p216 = por %p214, %p215
    %s218 = sadd.s32 %s217, 1
    %p221 = scmp.eq.s32.totalorder %s16, 1
    %p222 = scmp.ne.s32.totalorder %s217, %s219
    %p223 = scmp.eq.s32.totalorder %s16, 0
    %p224 = por %p222, %p223
    %p225 = scmp.ne.s32.totalorder %s217, %s219
    %p226 = scmp.eq.s32.totalorder %s21, 1
    %p227 = por %p225, %p226
    %p228 = scmp.ne.s32.totalorder %s219, %s220
    %p229 = scmp.eq.s32.totalorder %s21, 0
    %p230 = por %p228, %p229
    %p231 = scmp.ne.s32.totalorder %s219, %s220
    %p232 = scmp.eq.s32.totalorder %s22, 1
    %p233 = por %p231, %p232
    %p235 = scmp.ne.s32.totalorder %s220, %s234
    %p236 = scmp.eq.s32.totalorder %s22, 0
    %p237 = por %p235, %p236
    %s239 = sadd.s32 %s238, 1
    %p242 = scmp.eq.s32.totalorder %s16, 1
    %p243 = scmp.ne.s32.totalorder %s238, %s240
    %p244 = scmp.eq.s32.totalorder %s16, 0
    %p245 = por %p243, %p244
    %p246 = scmp.ne.s32.totalorder %s238, %s240
    %p247 = scmp.eq.s32.totalorder %s21, 1
    %p248 = por %p246, %p247
    %p249 = scmp.ne.s32.totalorder %s240, %s241
    %p250 = scmp.eq.s32.totalorder %s21, 0
    %p251 = por %p249, %p250
    %p252 = scmp.ne.s32.totalorder %s240, %s241
    %p253 = scmp.eq.s32.totalorder %s22, 1
    %p254 = por %p252, %p253
    %p256 = scmp.ne.s32.totalorder %s241, %s255
    %p257 = scmp.eq.s32.totalorder %s22, 0
    %p258 = por %p256, %p257
    %s260 = sadd.s32 %s259, 1
    %p263 = scmp.eq.s32.totalorder %s16, 1
    %p264 = scmp.ne.s32.totalorder %s259, %s261
    %p265 = scmp.eq.s32.totalorder %s16, 0
    %p266 = por %p264, %p265
    %p267 = scmp.ne.s32.totalorder %s259, %s261
    %p268 = scmp.eq.s32.totalorder %s21, 1
    %p269 = por %p267, %p268
    %p270 = scmp.ne.s32.totalorder %s261, %s262
    %p271 = scmp.eq.s32.totalorder %s21, 0
    %p272 = por %p270, %p271
    %p273 = scmp.ne.s32.totalorder %s261, %s262
    %p274 = scmp.eq.s32.totalorder %s22, 1
    %p275 = por %p273, %p274
    %p277 = scmp.ne.s32.totalorder %s262, %s276
    %p278 = scmp.eq.s32.totalorder %s22, 0
    %p279 = por %p277, %p278
    %s280 = ssub.s32 %s23, %s35
    %s281 = ssub.s32 %s24, %s31
    %s282 = sor.u32 %s280, %s281
    %p283 = scmp.eq.s32.totalorder %s282, 0
    %s285 = sadd.s32 %s284, 1
    %s286 = scalar_select %p283, %s284, %s285
    %p289 = pneg %p283
    %p290 = scmp.eq.s32.totalorder %s16, 1
    %p291 = por %p289, %p290
    %p292 = scmp.ne.s32.totalorder %s284, %s287
    %p293 = scmp.eq.s32.totalorder %s16, 0
    %p294 = por %p292, %p293
    %p295 = scmp.ne.s32.totalorder %s284, %s287
    %p296 = scmp.eq.s32.totalorder %s21, 1
    %p297 = por %p295, %p296
    %p298 = scmp.ne.s32.totalorder %s287, %s288
    %p299 = scmp.eq.s32.totalorder %s21, 0
    %p300 = por %p298, %p299
    %p301 = scmp.ne.s32.totalorder %s287, %s288
    %p302 = scmp.eq.s32.totalorder %s22, 1
    %p303 = por %p301, %p302
    %p305 = scmp.ne.s32.totalorder %s288, %s304
    %p306 = scmp.eq.s32.totalorder %s22, 0
    %p307 = por %p305, %p306
    %p308 = scmp.le.s32.totalorder 1, %s16
    %p309 = scmp.lt.s32.totalorder %s16, 3
    %p310 = pnand %p308, %p309
    %p311 = pneg %p310
    // Predicated region
    $region9: #{r_model_forward.1} parent=5 // pred_check
      _
    $region10: #{r_model_forward.1} parent=5 // pred_check_branch
      %313 = sbr.rel (%p310) target = $region12
    $region11: #{r_model_forward.1} parent=5 // pred_region
      %s314 = ssub.s32 %s16, 1
      // Predicated region
      $region13: #{r_model_forward.1} parent=11 // pred_check
        %p315 = pneg %p209
      $region14: #{r_model_forward.1} parent=11 // pred_check_branch
        %317 = sbr.rel (%p315) target = $region16
      $region15: #{r_model_forward.1} parent=11 // pred_region
        _
      $region16: #{r_model_forward.1} parent=11 // pred_fallthru
        _
      // Predicated region
      $region17: #{r_model_forward.1} parent=11 // pred_check
        %p318 = pneg %p230
      $region18: #{r_model_forward.1} parent=11 // pred_check_branch
        %320 = sbr.rel (%p318) target = $region20
      $region19: #{r_model_forward.1} parent=11 // pred_region
        _
      $region20: #{r_model_forward.1} parent=11 // pred_fallthru
        _
      // Predicated region
      $region21: #{r_model_forward.1} parent=11 // pred_check
        %p321 = pneg %p251
      $region22: #{r_model_forward.1} parent=11 // pred_check_branch
        %323 = sbr.rel (%p321) target = $region24
      $region23: #{r_model_forward.1} parent=11 // pred_region
        _
      $region24: #{r_model_forward.1} parent=11 // pred_fallthru
        _
      // Predicated region
      $region25: #{r_model_forward.1} parent=11 // pred_check
        %p324 = pneg %p272
      $region26: #{r_model_forward.1} parent=11 // pred_check_branch
        %326 = sbr.rel (%p324) target = $region28
      $region27: #{r_model_forward.1} parent=11 // pred_region
        _
      $region28: #{r_model_forward.1} parent=11 // pred_fallthru
        _
    $region12: #{r_model_forward.1} parent=5 // pred_fallthru
      _
    %p327 = scmp.lt.s32.totalorder %s16, 2
    // Predicated region
    $region29: #{r_model_forward.1} parent=5 // pred_check
      %p328 = pneg %p327
    $region30: #{r_model_forward.1} parent=5 // pred_check_branch
      %330 = sbr.rel (%p328) target = $region32
    $region31: #{r_model_forward.1} parent=5 // pred_region
      // Predicated region
      $region33: #{r_model_forward.1} parent=31 // pred_check
        %p331 = pneg %p48
      $region34: #{r_model_forward.1} parent=31 // pred_check_branch
        %333 = sbr.rel (%p331) target = $region36
      $region35: #{r_model_forward.1} parent=31 // pred_region
        %p334 = scmp.lt.s32.totalorder %s23, 1
        %s335 = scalar_select %p334, %s23, 1
        %s336 = smul.addr %s335, 2
        %s337 = smul.addr %s336, 4
        %s338 = scalar_lea.vmem %s0, %s337
      $region36: #{r_model_forward.1} parent=31 // pred_fallthru
        _
      // Predicated region
      $region37: #{r_model_forward.1} parent=31 // pred_check
        %p339 = pneg %p76
      $region38: #{r_model_forward.1} parent=31 // pred_check_branch
        %341 = sbr.rel (%p339) target = $region40
      $region39: #{r_model_forward.1} parent=31 // pred_region
        %s342 = smul.u32 2, %s24
        %p343 = scmp.lt.s32.totalorder %s23, 1
        %s344 = scalar_select %p343, %s23, 1
        %p345 = scmp.lt.s32.totalorder %s342, 1
        %s346 = scalar_select %p345, %s342, 1
        %s347 = smul.addr %s344, 2
        %s348 = sadd.s32 %s346, %s347
        %s349 = smul.addr %s348, 4
        %s350 = scalar_lea.vmem %s1, %s349
        %s351 = smul.u32 2, %s24
      $region40: #{r_model_forward.1} parent=31 // pred_fallthru
        _
      // Predicated region
      $region41: #{r_model_forward.1} parent=31 // pred_check
        %p352 = pneg %p102
      $region42: #{r_model_forward.1} parent=31 // pred_check_branch
        %354 = sbr.rel (%p352) target = $region44
      $region43: #{r_model_forward.1} parent=31 // pred_region
        %p355 = scmp.lt.s32.totalorder %s23, 1
        %s356 = scalar_select %p355, %s23, 1
        %s357 = smul.addr %s356, 2
        %s358 = smul.addr %s357, 4
        %s359 = scalar_lea.vmem %s2, %s358
      $region44: #{r_model_forward.1} parent=31 // pred_fallthru
        _
      // Predicated region
      $region45: #{r_model_forward.1} parent=31 // pred_check
        %p360 = pneg %p128
      $region46: #{r_model_forward.1} parent=31 // pred_check_branch
        %362 = sbr.rel (%p360) target = $region48
      $region47: #{r_model_forward.1} parent=31 // pred_region
        %p363 = scmp.lt.s32.totalorder %s23, 1
        %s364 = scalar_select %p363, %s23, 1
        %s365 = smul.addr %s364, 2
        %s366 = scalar_lea.vmem %s3, %s365
      $region48: #{r_model_forward.1} parent=31 // pred_fallthru
        _
      // Predicated region
      $region49: #{r_model_forward.1} parent=31 // pred_check
        %p367 = pneg %p156
      $region50: #{r_model_forward.1} parent=31 // pred_check_branch
        %369 = sbr.rel (%p367) target = $region52
      $region51: #{r_model_forward.1} parent=31 // pred_region
        %s370 = smul.u32 2, %s24
        %p371 = scmp.lt.s32.totalorder %s23, 1
        %s372 = scalar_select %p371, %s23, 1
        %p373 = scmp.lt.s32.totalorder %s370, 1
        %s374 = scalar_select %p373, %s370, 1
        %s375 = smul.addr %s372, 2
        %s376 = sadd.s32 %s374, %s375
        %s377 = scalar_lea.vmem %s4, %s376
        %s378 = smul.u32 2, %s24
      $region52: #{r_model_forward.1} parent=31 // pred_fallthru
        _
      // Predicated region
      $region53: #{r_model_forward.1} parent=31 // pred_check
        %p379 = pneg %p182
      $region54: #{r_model_forward.1} parent=31 // pred_check_branch
        %381 = sbr.rel (%p379) target = $region56
      $region55: #{r_model_forward.1} parent=31 // pred_region
        %p382 = scmp.lt.s32.totalorder %s23, 1
        %s383 = scalar_select %p382, %s23, 1
        %s384 = smul.addr %s383, 2
        %s385 = scalar_lea.vmem %s5, %s384
      $region56: #{r_model_forward.1} parent=31 // pred_fallthru
        _
    $region32: #{r_model_forward.1} parent=5 // pred_fallthru
      _
    %p386 = scmp.le.s32.totalorder 1, %s16
    %p387 = scmp.lt.s32.totalorder %s16, 3
    %p388 = pnand %p386, %p387
    %p389 = pneg %p388
    // Predicated region
    $region57: #{r_model_forward.1} parent=5 // pred_check
      _
    $region58: #{r_model_forward.1} parent=5 // pred_check_branch
      %391 = sbr.rel (%p388) target = $region60
    $region59: #{r_model_forward.1} parent=5 // pred_region
      %s392 = ssub.s32 %s16, 1
      %p393 = scmp.lt.s32.totalorder %s25, 1
      %s394 = scalar_select %p393, %s25, 1
      %s395 = smul.addr %s394, 2
      %s396 = smul.addr %s395, 4
      %s397 = scalar_lea.vmem %s0, %s396
      %p398 = pneg %p54
      %p399 = pneg %p51
      %s400 = smul.u32 2, %s26
      %p401 = scmp.lt.s32.totalorder %s25, 1
      %s402 = scalar_select %p401, %s25, 1
      %p403 = scmp.lt.s32.totalorder %s400, 1
      %s404 = scalar_select %p403, %s400, 1
      %s405 = smul.addr %s402, 2
      %s406 = sadd.s32 %s404, %s405
      %s407 = smul.addr %s406, 4
      %s408 = scalar_lea.vmem %s1, %s407
      %p409 = pneg %p82
      %p410 = pneg %p79
      %p411 = scmp.lt.s32.totalorder %s25, 1
      %s412 = scalar_select %p411, %s25, 1
      %s413 = smul.addr %s412, 2
      %s414 = smul.addr %s413, 4
      %s415 = scalar_lea.vmem %s2, %s414
      %p416 = pneg %p108
      %p417 = pneg %p105
      %p418 = scmp.lt.s32.totalorder %s25, 1
      %s419 = scalar_select %p418, %s25, 1
      %s420 = smul.addr %s419, 2
      %s421 = scalar_lea.vmem %s3, %s420
      %p422 = pneg %p134
      %p423 = pneg %p131
      %s424 = smul.u32 2, %s26
      %p425 = scmp.lt.s32.totalorder %s25, 1
      %s426 = scalar_select %p425, %s25, 1
      %p427 = scmp.lt.s32.totalorder %s424, 1
      %s428 = scalar_select %p427, %s424, 1
      %s429 = smul.addr %s426, 2
      %s430 = sadd.s32 %s428, %s429
      %s431 = scalar_lea.vmem %s4, %s430
      %p432 = pneg %p162
      %p433 = pneg %p159
      %p434 = scmp.lt.s32.totalorder %s25, 1
      %s435 = scalar_select %p434, %s25, 1
      %s436 = smul.addr %s435, 2
      %s437 = scalar_lea.vmem %s5, %s436
      %p438 = pneg %p188
      %p439 = pneg %p185
      %p440 = pneg %p209
      %p441 = pneg %p206
      %p442 = pneg %p230
      %p443 = pneg %p227
      %p444 = pneg %p251
      %p445 = pneg %p248
      %p446 = pneg %p272
      %p447 = pneg %p269
      %p448 = pneg %p300
      %p449 = pneg %p297
      %s450 = smul.u32 2, %s26
      %p451 = scmp.lt.s32.totalorder %s25, 1
      %s452 = scalar_select %p451, %s25, 1
      %p453 = scmp.lt.s32.totalorder %s450, 1
      %s454 = scalar_select %p453, %s450, 1
      %s455 = smul.addr %s452, 2
      %s456 = sadd.s32 %s454, %s455
      %s457 = smul.addr %s456, 4
      %s458 = scalar_lea.vmem %s10, %s457
      %p459 = scmp.lt.s32.totalorder %s25, 1
      %s460 = scalar_select %p459, %s25, 1
      %s461 = smul.addr %s460, 2
      %s462 = smul.addr %s461, 4
      %s463 = scalar_lea.vmem %s0, %s462
      %s464 = smul.u32 2, %s26
      %p465 = scmp.lt.s32.totalorder %s25, 1
      %s466 = scalar_select %p465, %s25, 1
      %p467 = scmp.lt.s32.totalorder %s464, 1
      %s468 = scalar_select %p467, %s464, 1
      %s469 = smul.addr %s466, 2
      %s470 = sadd.s32 %s468, %s469
      %s471 = smul.addr %s470, 4
      %s472 = scalar_lea.vmem %s1, %s471
      %s473 = smul.u32 2, %s26
      %p474 = scmp.lt.s32.totalorder %s25, 1
      %s475 = scalar_select %p474, %s25, 1
      %s476 = smul.addr %s475, 2
      %s477 = smul.addr %s476, 4
      %s478 = scalar_lea.vmem %s2, %s477
      %p479 = scmp.lt.s32.totalorder %s25, 1
      %s480 = scalar_select %p479, %s25, 1
      %s481 = smul.addr %s480, 2
      %s482 = scalar_lea.vmem %s3, %s481
      %s483 = smul.u32 2, %s26
      %p484 = scmp.lt.s32.totalorder %s25, 1
      %s485 = scalar_select %p484, %s25, 1
      %p486 = scmp.lt.s32.totalorder %s483, 1
      %s487 = scalar_select %p486, %s483, 1
      %s488 = smul.addr %s485, 2
      %s489 = sadd.s32 %s487, %s488
      %s490 = scalar_lea.vmem %s4, %s489
      %s491 = smul.u32 2, %s26
      %p492 = scmp.lt.s32.totalorder %s25, 1
      %s493 = scalar_select %p492, %s25, 1
      %s494 = smul.addr %s493, 2
      %s495 = scalar_lea.vmem %s5, %s494
      %s496 = smul.u32 2, %s26
      %p497 = scmp.lt.s32.totalorder %s25, 1
      %s498 = scalar_select %p497, %s25, 1
      %p499 = scmp.lt.s32.totalorder %s496, 1
      %s500 = scalar_select %p499, %s496, 1
      %s501 = smul.addr %s498, 2
      %s502 = sadd.s32 %s500, %s501
      %s503 = smul.addr %s502, 4
      %s504 = scalar_lea.vmem %s10, %s503
      %s505 = smul.u32 2, %s26
      %vm507 = vcmask 913272
      %508 = vst.msk [vmem:[#allocation2] sm:$0xf] %vm507, 0.0
      %vm509 = vcmask 134272
      %510 = vst.msk [vmem:[#allocation2 + $0xc] sm:$0xf] %vm509, 0.0
      %v511 = vld [vmem:[%s472] sm:$0x77]
      %512 = vst [vmem:[#allocation2 + $0x4] sm:$0x77] %v511
      %v513 = vld [vmem:[%s490] sm:$0x3]
      %v514 = vlaneseq
      %vm515 = vcmp.ge.s32.totalorder %v514, 0
      %vm516 = vcmp.lt.s32.totalorder %v514, 256
      %vm517 = vmand %vm515, %vm516
      %s518 = scalar_lea.vmem [#allocation2], 7
      %519 = vst.msk [vmem:[%s518] ss:$4 sm:$0x3] %vm517, %v513
      %p520 = scmp.gt.s32.totalorder %s26, 0
      %p521 = scmp.lt.s32.totalorder %s26, 0
      %v522 = vld [vmem:[%s463 + $0x4] sm:$0x7]
      %v523 = vld [vmem:[%s482 + $0x1] sm:$0x1]
      %v524 = vld [vmem:[%s478] sm:$0x7]
      %v525 = vld [vmem:[%s495] sm:$0x1]
      %s526 = scalar_select %p520, 1, 0
      %v527 = vstv %s526
      %vm528 = vcmp.eq.s32.totalorder %v527, 1
      %v529 = vsel %vm528, %v522, 0.0
      %vm530 = vcmask 1043328
      %531 = vst.msk [vmem:[#allocation2] sm:$0x7] %vm530, %v529
      %v532 = vsel %vm528, %v523, 0.0
      %vm533 = vcmask 1041280
      %534 = vst.msk [vmem:[#allocation2 + $0x3] sm:$0x1] %vm533, %v532
      %s535 = scalar_select %p521, 1, 0
      %v536 = vstv %s535
      %vm537 = vcmp.eq.s32.totalorder %v536, 1
      %v538 = vsel %vm537, %v524, 0.0
      %vm539 = vcmask 124928
      %540 = vst.msk [vmem:[#allocation2 + $0xc] sm:$0x7] %vm539, %v538
      %v541 = vsel %vm537, %v525, 0.0
      %vm542 = vcmask 122880
      %543 = vst.msk [vmem:[#allocation2 + $0xf] sm:$0x1] %vm542, %v541
      %v544 = vlaneseq
      %v545 = vand.u32 %v544, 127
      %v546 = vadd.s32 %v545, 128
      %vm547 = vcmp.lt.s32.totalorder %v545, 0
      %v548 = vsub.s32 0, %v545
      %v549 = vsel %vm547, %v548, %v545
      %v550 = vshrl.u32 %v549, 4
      %v551 = vand.u32 %v549, 15
      %v552 = vsub.s32 0, %v551
      %v553 = vsel %vm547, %v552, %v551
      %vm554 = vcmp.lt.s32.totalorder %v546, 0
      %v555 = vsub.s32 0, %v546
      %v556 = vsel %vm554, %v555, %v546
      %v557 = vshrl.u32 %v556, 4
      %v558 = vand.u32 %v556, 15
      %v559 = vsub.s32 0, %v558
      %v560 = vsel %vm554, %v559, %v558
      %vm561 = vcmp.ne.s32.totalorder %v553, 0
      %vm562 = vcmp.ne.s32.totalorder %v560, 0
      %vm563 = vcmp.lt.s32.totalorder %v553, 0
      %vm564 = vcmp.lt.s32.totalorder %v560, 0
      %vm565 = vmand %vm563, %vm561
      %vm566 = vmand %vm564, %vm562
      %v567 = vadd.s32 %v553, 16
      %v568 = vadd.s32 %v560, 16
      %v569 = vsel %vm565, %v567, %v553
      %v570 = vsel %vm566, %v568, %v560
      %vm571 = vcmp.ne.s32.totalorder %v569, 0
      %vm572 = vcmp.ne.s32.totalorder %v570, 0
      %vm573 = vcmp.ne.s32.totalorder %v569, 15
      %vm574 = vcmp.ne.s32.totalorder %v570, 15
      %v575 = vld [vmem:[#allocation2] sm:$0xff]
      %v576 = vld [vmem:[#allocation2 + $0x8] sm:$0xf]
      %v579 = vcombine.high %v575, %v575
      %580 = vrot.lane.b32.xlu0 %v575, 17
      %v581 = vpop.permute.xlu0 %580
      %582 = vrot.lane.b32.xlu0 %v579, 17
      %v583 = vpop.permute.xlu0 %582
      %584 = vrot.lane.b32.xlu0 %v576, 17
      %v585 = vpop.permute.xlu0 %584
      %vm586 = vcmask 138240
      %v587 = vsel %vm586, %v581, %v583
      %v588 = vsel %vm586, %v583, %v585
      %v591 = vsel %vm571, %v587, 0.0
      %v592 = vsel %vm572, %v588, 0.0
      %v593 = vpack.c.bf16 %v591, %v591
      %v594 = vpack.c.bf16 %v592, %v592
      %v596 = vpack.c.bf16 %v575, %v575
      %v597 = vpack.c.bf16 %v579, %v579
      %v598 = vpack.c.bf16 %v576, %v576
      %v602 = vrot.slane %v596, 6
      %v603 = vrot.slane %v597, 6
      %v604 = vrot.slane %v598, 6
      %605 = vrot.lane.b32.xlu0 %v602, 16
      %v606 = vpop.permute.xlu0 %605
      %607 = vrot.lane.b32.xlu0 %v603, 16
      %v608 = vpop.permute.xlu0 %607
      %609 = vrot.lane.b32.xlu0 %v604, 16
      %v610 = vpop.permute.xlu0 %609
      %vm611 = vcmask 130048
      %v612 = vsel %vm611, %v606, %v608
      %v613 = vsel %vm611, %v608, %v610
      %vm614 = vcmask 1041408
      %v617 = vsel %vm614, %v593, %v612
      %v620 = vsel %vm614, %v594, %v613
      %v623 = vunpack.c.l.b16 %v617
      %v624 = vunpack.c.l.b16 %v620
      %v625 = vpack.c.b16 %v624, %v623
      %627 = vst [vmem:[#allocation3] sm:$0xff] %v625
      %v628 = vld [vmem:[#allocation2] sm:$0xff]
      %v629 = vld [vmem:[#allocation2 + $0x8] sm:$0xf]
      %v632 = vcombine.high %v628, %v628
      %633 = vrot.lane.b32.xlu0 %v628, 15
      %v634 = vpop.permute.xlu0 %633
      %635 = vrot.lane.b32.xlu0 %v632, 15
      %v636 = vpop.permute.xlu0 %635
      %637 = vrot.lane.b32.xlu0 %v629, 15
      %v638 = vpop.permute.xlu0 %637
      %vm639 = vcmask 121856
      %v640 = vsel %vm639, %v634, %v636
      %v641 = vsel %vm639, %v636, %v638
      %v644 = vsel %vm573, %v640, 0.0
      %v645 = vsel %vm574, %v641, 0.0
      %v646 = vpack.c.bf16 %v644, %v644
      %v647 = vpack.c.bf16 %v645, %v645
      %648 = vrot.lane.b32.xlu0 %v628, 1
      %v649 = vpop.permute.xlu0 %648
      %650 = vrot.lane.b32.xlu0 %v632, 1
      %v651 = vpop.permute.xlu0 %650
      %652 = vrot.lane.b32.xlu0 %v629, 1
      %v653 = vpop.permute.xlu0 %652
      %vm654 = vcmask 7168
      %v655 = vsel %vm654, %v649, %v651
      %v656 = vsel %vm654, %v651, %v653
      %v659 = vsel %vm571, %v655, 0.0
      %v660 = vsel %vm572, %v656, 0.0
      %v661 = vpack.c.bf16 %v659, %v659
      %v662 = vpack.c.bf16 %v660, %v660
      %v665 = vrot.slane %v661, 6
      %v666 = vrot.slane %v662, 6
      %v669 = vsel %vm614, %v646, %v665
      %v672 = vsel %vm614, %v647, %v666
      %v675 = vunpack.c.l.b16 %v669
      %v676 = vunpack.c.l.b16 %v672
      %v677 = vpack.c.b16 %v676, %v675
      %679 = vst [vmem:[#allocation3 + $0x8] sm:$0xff] %v677
      %v680 = vld [vmem:[#allocation2 + $0x4] sm:$0xff]
      %v682 = vcombine.high %v680, %v680
      %v684 = vpack.c.bf16 %v680, %v680
      %v685 = vpack.c.bf16 %v682, %v682
      %v686 = vld [vmem:[#allocation2 + $0x4] sm:$0xff]
      %v687 = vld [vmem:[#allocation2 + $0xc] sm:$0xf]
      %v690 = vcombine.high %v686, %v686
      %691 = vrot.lane.b32.xlu0 %v686, 127
      %v692 = vpop.permute.xlu0 %691
      %693 = vrot.lane.b32.xlu0 %v690, 127
      %v694 = vpop.permute.xlu0 %693
      %695 = vrot.lane.b32.xlu0 %v687, 127
      %v696 = vpop.permute.xlu0 %695
      %vm697 = vcmask 1039360
      %v698 = vsel %vm697, %v692, %v694
      %v699 = vsel %vm697, %v694, %v696
      %v702 = vsel %vm573, %v698, 0.0
      %v703 = vsel %vm574, %v699, 0.0
      %v704 = vpack.c.bf16 %v702, %v702
      %v705 = vpack.c.bf16 %v703, %v703
      %v708 = vrot.slane %v704, 6
      %v709 = vrot.slane %v705, 6
      %v712 = vsel %vm614, %v684, %v708
      %v715 = vsel %vm614, %v685, %v709
      %v718 = vunpack.c.l.b16 %v712
      %v719 = vunpack.c.l.b16 %v715
      %v720 = vpack.c.b16 %v719, %v718
      %722 = vst [vmem:[#allocation3 + $0x10] sm:$0xff] %v720
      %v723 = vld [vmem:[#allocation2 + $0x4] sm:$0xff]
      %v724 = vld [vmem:[#allocation2 + $0xc] sm:$0xf]
      %v727 = vcombine.high %v723, %v723
      %728 = vrot.lane.b32.xlu0 %v723, 113
      %v729 = vpop.permute.xlu0 %728
      %730 = vrot.lane.b32.xlu0 %v727, 113
      %v731 = vpop.permute.xlu0 %730
      %732 = vrot.lane.b32.xlu0 %v724, 113
      %v733 = vpop.permute.xlu0 %732
      %vm734 = vcmask 924672
      %v735 = vsel %vm734, %v729, %v731
      %v736 = vsel %vm734, %v731, %v733
      %v739 = vsel %vm571, %v735, 0.0
      %v740 = vsel %vm572, %v736, 0.0
      %v741 = vpack.c.bf16 %v739, %v739
      %v742 = vpack.c.bf16 %v740, %v740
      %v744 = vpack.c.bf16 %v723, %v723
      %v745 = vpack.c.bf16 %v727, %v727
      %v746 = vpack.c.bf16 %v724, %v724
      %v750 = vrot.slane %v744, 6
      %v751 = vrot.slane %v745, 6
      %v752 = vrot.slane %v746, 6
      %753 = vrot.lane.b32.xlu0 %v750, 112
      %v754 = vpop.permute.xlu0 %753
      %755 = vrot.lane.b32.xlu0 %v751, 112
      %v756 = vpop.permute.xlu0 %755
      %757 = vrot.lane.b32.xlu0 %v752, 112
      %v758 = vpop.permute.xlu0 %757
      %vm759 = vcmask 916480
      %v760 = vsel %vm759, %v754, %v756
      %v761 = vsel %vm759, %v756, %v758
      %v764 = vsel %vm614, %v741, %v760
      %v767 = vsel %vm614, %v742, %v761
      %v770 = vunpack.c.l.b16 %v764
      %v771 = vunpack.c.l.b16 %v767
      %v772 = vpack.c.b16 %v771, %v770
      %774 = vst [vmem:[#allocation3 + $0x18] sm:$0xff] %v772
      %v775 = vld [vmem:[#allocation2 + $0x4] sm:$0xff]
      %v776 = vld [vmem:[#allocation2 + $0xc] sm:$0xf]
      %v779 = vcombine.high %v775, %v775
      %780 = vrot.lane.b32.xlu0 %v775, 111
      %v781 = vpop.permute.xlu0 %780
      %782 = vrot.lane.b32.xlu0 %v779, 111
      %v783 = vpop.permute.xlu0 %782
      %784 = vrot.lane.b32.xlu0 %v776, 111
      %v785 = vpop.permute.xlu0 %784
      %vm786 = vcmask 908288
      %v787 = vsel %vm786, %v781, %v783
      %v788 = vsel %vm786, %v783, %v785
      %v791 = vsel %vm573, %v787, 0.0
      %v792 = vsel %vm574, %v788, 0.0
      %v793 = vpack.c.bf16 %v791, %v791
      %v794 = vpack.c.bf16 %v792, %v792
      %v797 = vsel %vm614, %v793, 0
      %v799 = vsel %vm614, %v794, 0
      %v802 = vunpack.c.l.b16 %v797
      %v803 = vunpack.c.l.b16 %v799
      %v804 = vpack.c.b16 %v803, %v802
      %806 = vst [vmem:[#allocation3 + $0x20] sm:$0xff] %v804
      %v807 = vld [vmem:[%s6] sm:$0xf]
      %v808 = vld [vmem:[%s6 + $0x4] sm:$0xf]
      %v809 = vld [vmem:[%s6 + $0x8] sm:$0xf]
      %v810 = vld [vmem:[%s6 + $0xc] sm:$0xf]
      %v811 = vld [vmem:[#allocation3] sm:$0xff]
      %v812 = vld [vmem:[#allocation3 + $0x8] sm:$0xff]
      %v813 = vld [vmem:[#allocation3 + $0x10] sm:$0xff]
      %v814 = vld [vmem:[#allocation3 + $0x18] sm:$0xff]
      %v815 = vld [vmem:[#allocation3 + $0x20] sm:$0xff]
      %v816 = vld [vmem:[%s7] sm:$0xff]
      %v817 = vld [vmem:[%s7 + $0x8] sm:$0xff]
      %v818 = vld [vmem:[%s7 + $0x10] sm:$0xff]
      %v819 = vld [vmem:[%s7 + $0x18] sm:$0xff]
      %821 = vset.pattern.permute.xlu0 0
      %822 = vperm.xlu0 %821, %v816
      %v823 = vpop.permute.xlu0 %822
      %826 = vset.pattern.permute.xlu0 0
      %827 = vperm.xlu0 %826, %v817
      %v828 = vpop.permute.xlu0 %827
      %831 = vset.pattern.permute.xlu0 0
      %832 = vperm.xlu0 %831, %v818
      %v833 = vpop.permute.xlu0 %832
      %836 = vset.pattern.permute.xlu0 0
      %837 = vperm.xlu0 %836, %v819
      %v838 = vpop.permute.xlu0 %837
      %v844 = vunpack.c.l.b16 %v807
      %v845 = vunpack.c.l.b16 %v808
      %v846 = vunpack.c.l.b16 %v809
      %v847 = vunpack.c.l.b16 %v810
      %v848 = vpack.c.b16 %v845, %v844
      %v849 = vpack.c.b16 %v847, %v846
      %v855 = vunpack.c.l.b16 %v811
      %v856 = vunpack.c.h.b16 %v811
      %v857 = vunpack.c.l.b16 %v812
      %v858 = vunpack.c.h.b16 %v812
      %v859 = vunpack.c.l.b16 %v813
      %v860 = vunpack.c.h.b16 %v813
      %v861 = vunpack.c.l.b16 %v814
      %v862 = vunpack.c.h.b16 %v814
      %v863 = vunpack.c.l.b16 %v815
      %v864 = vunpack.c.h.b16 %v815
      %v865 = vpack.c.b16 %v857, %v855
      %v866 = vpack.c.b16 %v858, %v856
      %v867 = vpack.c.b16 %v861, %v859
      %v868 = vpack.c.b16 %v862, %v860
      %v869 = vpack.c.b16 %v863, %v863
      %v870 = vpack.c.b16 %v864, %v864
      %vm875 = vcmask 326656
      %v877 = vsel %vm875, %v848, 0
      %v880 = vsel %vm875, %v849, 0
      %vm882 = vcmask 1043456
      %v884 = vsel %vm882, %v869, 0
      %v887 = vsel %vm882, %v870, 0
      %889 = vmatprep.subr.bf16.mxu0 0
      %890 = vmatpush1.bf16.msra.mxu0 0
      %891 = vmatprep.subr.bf16.mxu0 0
      %892 = vmatpush1.bf16.msra.mxu0 0
      %893 = vmatprep.subr.bf16.mxu0 0
      %894 = vmatpush1.bf16.msra.mxu0 0
      %895 = vmatprep.subr.bf16.mxu0 0
      %896 = vmatpush1.bf16.msra.mxu0 0
      %897 = vmatprep.subr.bf16.mxu0 0
      %898 = vmatpush1.bf16.msra.mxu0 0
      %899 = vmatprep.subr.bf16.mxu0 %v887
      %900 = vmatpush1.bf16.msra.mxu0 %v884
      %901 = vmatprep.subr.bf16.mxu0 %v868
      %902 = vmatpush1.bf16.msra.mxu0 %v867
      %903 = vmatprep.subr.bf16.mxu0 %v866
      %904 = vmatpush1.bf16.msra.mxu0 %v865
      %905 = vmatprep.subr.bf16.mxu0 0
      %906 = vmatpush2.bf16.msra.mxu0 0
      %907 = vmatprep.subr.bf16.mxu0 0
      %908 = vmatpush2.bf16.msra.mxu0 0
      %909 = vmatprep.subr.bf16.mxu0 0
      %910 = vmatpush2.bf16.msra.mxu0 0
      %911 = vmatprep.subr.bf16.mxu0 0
      %912 = vmatpush2.bf16.msra.mxu0 0
      %913 = vmatprep.subr.bf16.mxu0 0
      %914 = vmatpush2.bf16.msra.mxu0 0
      %915 = vmatprep.subr.bf16.mxu0 0
      %916 = vmatpush2.bf16.msra.mxu0 0
      %917 = vmatprep.subr.bf16.mxu0 0
      %918 = vmatpush2.bf16.msra.mxu0 0
      %919 = vmatprep.subr.bf16.mxu0 0
      %920 = vmatpush2.bf16.msra.mxu0 0
      %921 = vmatprep.mubr.bf16.mxu0 0
      %922 = vmatmul.mubr.bf16.gmra.mxu0 %v877
      %v923 = vpop.f32.mrf.mxu0
      %v924 = vadd.f32 %v823, %v923
      %v925 = vpop.f32.mrf.mxu0
      %v926 = vadd.f32 %v823, %v925
      %v927 = vpop.f32.mrf.mxu0
      %v928 = vadd.f32 %v828, %v927
      %v929 = vpop.f32.mrf.mxu0
      %v930 = vadd.f32 %v828, %v929
      %931 = vmatprep.mubr.bf16.mxu0 0
      %932 = vmatmul.mubr.bf16.gmra.mxu0 %v880
      %v933 = vpop.f32.mrf.mxu0
      %v934 = vadd.f32 %v833, %v933
      %v935 = vpop.f32.mrf.mxu0
      %v936 = vadd.f32 %v833, %v935
      %v937 = vpop.f32.mrf.mxu0
      %v938 = vadd.f32 %v838, %v937
      %v939 = vpop.f32.mrf.mxu0
      %v940 = vadd.f32 %v838, %v939
      %941 = vdwg.mxu0
      %v942 = vmax.f32 %v924, 0.0
      %v943 = vmax.f32 %v926, 0.0
      %v944 = vmax.f32 %v928, 0.0
      %v945 = vmax.f32 %v930, 0.0
      %v946 = vmax.f32 %v934, 0.0
      %v947 = vmax.f32 %v936, 0.0
      %v948 = vmax.f32 %v938, 0.0
      %v949 = vmax.f32 %v940, 0.0
      %v950 = vld [vmem:[%s8] sm:$0x3]
      %v951 = vpack.c.bf16 %v944, %v942
      %v952 = vpack.c.bf16 %v945, %v943
      %v953 = vpack.c.bf16 %v948, %v946
      %v954 = vpack.c.bf16 %v949, %v947
      %v955 = vld [vmem:[%s9] sm:$0x7]
      %957 = vset.pattern.permute.xlu0 0
      %958 = vperm.xlu0 %957, %v955
      %v959 = vpop.permute.xlu0 %958
      %vm961 = vcmask 261120
      %v963 = vsel %vm961, %v950, 0
      %965 = vmatprep.subr.bf16.mxu0 0
      %966 = vmatpush1.bf16.msra.mxu0 0
      %967 = vmatprep.subr.bf16.mxu0 0
      %968 = vmatpush1.bf16.msra.mxu0 0
      %969 = vmatprep.subr.bf16.mxu0 0
      %970 = vmatpush1.bf16.msra.mxu0 0
      %971 = vmatprep.subr.bf16.mxu0 0
      %972 = vmatpush1.bf16.msra.mxu0 0
      %973 = vmatprep.subr.bf16.mxu0 0
      %974 = vmatpush1.bf16.msra.mxu0 0
      %975 = vmatprep.subr.bf16.mxu0 0
      %976 = vmatpush1.bf16.msra.mxu0 0
      %977 = vmatprep.subr.bf16.mxu0 %v954
      %978 = vmatpush1.bf16.msra.mxu0 %v953
      %979 = vmatprep.subr.bf16.mxu0 %v952
      %980 = vmatpush1.bf16.msra.mxu0 %v951
      %981 = vmatprep.subr.bf16.mxu0 0
      %982 = vmatpush2.bf16.msra.mxu0 0
      %983 = vmatprep.subr.bf16.mxu0 0
      %984 = vmatpush2.bf16.msra.mxu0 0
      %985 = vmatprep.subr.bf16.mxu0 0
      %986 = vmatpush2.bf16.msra.mxu0 0
      %987 = vmatprep.subr.bf16.mxu0 0
      %988 = vmatpush2.bf16.msra.mxu0 0
      %989 = vmatprep.subr.bf16.mxu0 0
      %990 = vmatpush2.bf16.msra.mxu0 0
      %991 = vmatprep.subr.bf16.mxu0 0
      %992 = vmatpush2.bf16.msra.mxu0 0
      %993 = vmatprep.subr.bf16.mxu0 0
      %994 = vmatpush2.bf16.msra.mxu0 0
      %995 = vmatprep.subr.bf16.mxu0 0
      %996 = vmatpush2.bf16.msra.mxu0 0
      %997 = vmatprep.mubr.bf16.mxu0 0
      %998 = vmatmul.mubr.bf16.gmra.mxu0 %v963
      %v999 = vpop.f32.mrf.mxu0
      %v1000 = vadd.f32 %v959, %v999
      %v1001 = vpop.f32.mrf.mxu0
      %v1002 = vadd.f32 %v959, %v1001
      %v1003 = vpop.f32.mrf.mxu0
      %v1004 = vpop.f32.mrf.mxu0
      %1005 = vdwg.mxu0
      %v1006 = vxor.u32 %v1000, 2147483648
      %v1007 = vxor.u32 %v1002, 2147483648
      %v1008 = vmul.f32 %v1006, 1.442695
      %v1009 = vpow.pop %v1008
      %v1010 = vmul.f32 %v1007, 1.442695
      %v1011 = vpow.pop %v1010
      %v1012 = vadd.f32 %v1009, 1.0
      %v1013 = vadd.f32 %v1011, 1.0
      %v1014 = vrcp.pop %v1012
      %v1015 = vmul.f32 1.0, %v1014
      %v1016 = vrcp.pop %v1013
      %v1017 = vmul.f32 1.0, %v1016
      %v1020 = vcombine.low %v1015, %v1017
      %1022 = vst [vmem:[%s504] sm:$0x77] %v1020
      %s1023 = smul.u32 2, %s26
      %p1024 = scmp.lt.s32.totalorder %s25, 1
      %s1025 = scalar_select %p1024, %s25, 1
      %p1026 = scmp.lt.s32.totalorder %s1023, 1
      %s1027 = scalar_select %p1026, %s1023, 1
      %s1028 = smul.addr %s1025, 2
      %s1029 = sadd.s32 %s1027, %s1028
      %s1030 = smul.addr %s1029, 4
      %s1031 = scalar_lea.vmem %s10, %s1030
      // Predicated region
      $region61: #{r_model_forward.1} parent=59 // pred_check
        %p1032 = pneg %p297
      $region62: #{r_model_forward.1} parent=59 // pred_check_branch
        %1034 = sbr.rel (%p1032) target = $region64
      $region63: #{r_model_forward.1} parent=59 // pred_region
        %s1035 = smul.u32 2, %s26
      $region64: #{r_model_forward.1} parent=59 // pred_fallthru
        _
    $region60: #{r_model_forward.1} parent=5 // pred_fallthru
      _
    %p1036 = scmp.le.s32.totalorder 2, %s16
    // Predicated region
    $region65: #{r_model_forward.1} parent=5 // pred_check
      %p1037 = pneg %p1036
    $region66: #{r_model_forward.1} parent=5 // pred_check_branch
      %1039 = sbr.rel (%p1037) target = $region68
    $region67: #{r_model_forward.1} parent=5 // pred_region
      %s1040 = ssub.s32 %s16, 2
      // Predicated region
      $region69: #{r_model_forward.1} parent=67 // pred_check
        %p1041 = pneg %p303
      $region70: #{r_model_forward.1} parent=67 // pred_check_branch
        %1043 = sbr.rel (%p1041) target = $region72
      $region71: #{r_model_forward.1} parent=67 // pred_region
        %s1044 = smul.u32 2, %s28
        %p1045 = scmp.lt.s32.totalorder %s27, 1
        %s1046 = scalar_select %p1045, %s27, 1
        %p1047 = scmp.lt.s32.totalorder %s1044, 1
        %s1048 = scalar_select %p1047, %s1044, 1
        %s1049 = smul.addr %s1046, 2
        %s1050 = sadd.s32 %s1048, %s1049
        %s1051 = smul.addr %s1050, 4
        %s1052 = scalar_lea.vmem %s10, %s1051
      $region72: #{r_model_forward.1} parent=67 // pred_fallthru
        _
    $region68: #{r_model_forward.1} parent=5 // pred_fallthru
      _
  $region6: #{r_model_forward.1} parent=0 // loop_footer
    %s20 = sadd.s32 1, %s16
  $region7: #{r_model_forward.1} parent=0 // loop_footer_branch
    %15 = sbr.rel target = $region3
  $region8: #{r_model_forward.1} parent=0 // loop_exit
    _

</llo_original>
